<compile_context>
chip_gen: v7x
topology: tpu7x:2x2x1
jax: 0.10.0
libtpu: 0.0.40
codegen_flags: <defaults>
</compile_context>

<pallas_src>
import functools
import math

import jax
import jax.numpy as jnp
from jax.experimental import pallas as pl
from jax.experimental.pallas import tpu as pltpu


def _round_up(v: int, m: int) -> int:
    return ((v + m - 1) // m) * m


def _cdiv(a: int, b: int) -> int:
    return (a + b - 1) // b


def _vmem_capacity_bytes() -> int:
    """Physical VMEM per TensorCore; conservative fallback if unqueryable."""
    try:
        return int(pltpu.get_tpu_info().vmem_capacity_bytes)
    except Exception:
        return 64 * 1024 * 1024  # v7x-sized fallback: safe on every generation


def _ranpac_tile_kernel(x_ref, w_ref, o_ref, *, negative_slope):
    # x_ref: (TB, D_in)  batch tile (dtype matched to the streamed weights)
    # w_ref: (TN, D_in)  TN rows of the fused (P*D_out, D_in) weight matrix
    # o_ref: (TB, TN)
    x = x_ref[...]
    w = w_ref[...]
    # x @ w.T without materializing a transpose of the (up to 16-32 MiB)
    # weight tile: contract dim 1 of both operands -> transposed-RHS matmul.
    y = jax.lax.dot_general(
        x, w,
        dimension_numbers=(((1,), (1,)), ((), ())),
        preferred_element_type=jnp.float32)                       # (TB, TN) f32
    y = jnp.where(y >= 0, y, jnp.float32(negative_slope) * y)     # leaky_relu (VPU)
    o_ref[...] = y.astype(o_ref.dtype)


def enhanced_ranpac_forward(x: jax.Array,
                            weights: jax.Array,
                            negative_slope_leaky_relu: float = 0.2,
                            *,
                            batch_tile: int = 256,
                            weight_buffer_count: int = 2,
                            max_weight_tile_bytes: int | None = None,
                            out_dtype=None) -> jax.Array:
    """x: (B, D_in); weights: (P, D_out, D_in)  ->  (B, D_out) float32."""
    B, D_in = x.shape
    P, D_out, D_in_w = weights.shape
    if D_in_w != D_in:
        raise ValueError(f"weight D_in {D_in_w} != x D_in {D_in}")

    # Weights arrive in whatever dtype init produced (bf16 by default) -- the
    # down-cast is hoisted out of the forward.  Match x to the narrower weight
    # dtype so the MXU runs a single-dtype matmul; accumulation stays f32 via
    # preferred_element_type.  (Casting x is a single pass over a tiny array.)
    if jnp.dtype(weights.dtype).itemsize < jnp.dtype(x.dtype).itemsize:
        x = x.astype(weights.dtype)
    # TODO(synk): fp8 weight-only streaming on v7x (bf16+fp8 MXU) would quarter
    # weight HBM traffic vs f32; not enabled since v5e/v6e have no fp8 MXU path.

    N = P * D_out
    w2d = weights.reshape(N, D_in)            # row-major reshape: no copy
    x_item = jnp.dtype(x.dtype).itemsize
    w_item = jnp.dtype(w2d.dtype).itemsize

    # ---- batch tiling (guards the resident-x assumption, feeds the MXU) -----
    tb = int(max(8, _round_up(min(batch_tile, max(B, 1)), 8)))
    B_padded = _round_up(max(B, 1), tb)
    grid_b = B_padded // tb

    # ---- generation-aware VMEM budget -> lane-dense tile over fused N -------
    vmem_cap = _vmem_capacity_bytes()
    vmem_limit = max(32 * 1024 * 1024, int(vmem_cap * 0.8))  # ~102 MiB v5e/v6e, ~51 MiB v7x
    # Per-weight-buffer cap: ~32 MiB on 128 MiB-VMEM chips, ~16 MiB on v7x.
    w_tile_cap = 32 * 1024 * 1024 if vmem_cap >= 96 * 1024 * 1024 else 16 * 1024 * 1024
    if max_weight_tile_bytes is not None:
        w_tile_cap = min(w_tile_cap, int(max_weight_tile_bytes))

    n_buf = max(2, int(weight_buffer_count))
    slack = 4 * 1024 * 1024                              # Mosaic scratch headroom
    x_bytes = 2 * tb * D_in * x_item                     # double-buffered x tile
    budget = max(vmem_limit - slack - x_bytes, 2 * 1024 * 1024)
    per_col = n_buf * D_in * w_item + 2 * tb * 4         # weight bufs + out bufs (f32 bound)
    tn_fit = (budget // per_col) // 128 * 128
    tn_cap = (w_tile_cap // max(D_in * w_item, 1)) // 128 * 128
    n_pad = _round_up(N, 128)
    tn = int(max(128, min(tn_fit, tn_cap, n_pad)))
    grid_n = _cdiv(N, tn)
    # Best-effort: keep the parallel N axis load-balanced across v7x's two TCs.
    if grid_n > 1 and grid_n % 2 == 1:
        for g in (grid_n + 1, grid_n + 3):
            tn_alt = int(max(128, _round_up(_cdiv(N, g), 128)))
            if _cdiv(N, tn_alt) % 2 == 0:
                tn, grid_n = tn_alt, _cdiv(N, tn_alt)
                break

    # Output dtype: f32 at small batch; bf16 once the activation writeback /
    # epilogue re-read rivals the weight stream (mean epilogue still sums in f32).
    if out_dtype is None:
        out_dtype = jnp.bfloat16 if (2 * B_padded * 4 >= D_in * w_item) else jnp.float32
    out_item = jnp.dtype(out_dtype).itemsize

    # Zero-pad the batch to a whole number of tiles (keeps every B block in
    # bounds; pad rows are exact zeros and are sliced off below).
    if B_padded != B:
        x_in = jnp.zeros((B_padded, D_in), x.dtype).at[:B, :].set(x)
    else:
        x_in = x

    kernel = functools.partial(
        _ranpac_tile_kernel,
        negative_slope=float(negative_slope_leaky_relu))

    w_spec_kwargs = {}
    if n_buf != 2:
        # Optional 3-deep weight pipelining (sweep 2 vs 3); costs one extra tile
        # of VMEM, which is already accounted for in the budget above.
        w_spec_kwargs["pipeline_mode"] = pl.Buffered(n_buf)

    flops = 2 * B_padded * D_in * grid_n * tn
    bytes_accessed = (N * D_in * w_item                     # weights: streamed once
                      + grid_n * B_padded * D_in * x_item   # x: refetched per N tile
                      + B_padded * grid_n * tn * out_item)  # output writeback

    y = pl.pallas_call(
        kernel,
        # Output padded to whole lane-dense tiles (unmasked stores); pad columns
        # (fed by Pallas' OOB tail weight block) are sliced off below and never
        # mix with real columns.
        out_shape=jax.ShapeDtypeStruct((B_padded, grid_n * tn), out_dtype),
        grid_spec=pltpu.PrefetchScalarGridSpec(
            num_scalar_prefetch=0,
            grid=(grid_n, grid_b),          # batch innermost: each weight tile
            in_specs=[                      # is DMA'd from HBM exactly once
                pl.BlockSpec((tb, D_in), lambda n, b: (b, 0)),
                pl.BlockSpec((tn, D_in), lambda n, b: (n, 0), **w_spec_kwargs),
            ],
            out_specs=pl.BlockSpec((tb, tn), lambda n, b: (b, n)),
        ),
        compiler_params=pltpu.CompilerParams(
            dimension_semantics=("parallel", "parallel"),  # megacore shards tiles
            vmem_limit_bytes=int(vmem_limit),
        ),
        cost_estimate=pl.CostEstimate(
            flops=int(flops),
            transcendentals=0,
            bytes_accessed=int(bytes_accessed)),
    )(x_in, w2d)

    # y[b, p*D_out + d] == leaky_relu(x[b] . W[p, d, :]) == stacked[p, b, d]
    y = y[:B, :N].astype(jnp.float32)
    stacked = jnp.transpose(y.reshape(B, P, D_out), (1, 0, 2))    # (P, B, D_out)

    # Exactly mirrors torch: stack(...).reshape(B, P, D_out) (flat
    # reinterpretation, NOT permute(1,0,2)) followed by mean(dim=1).
    x_proj = stacked.reshape(B, P, D_out)
    return jnp.mean(x_proj, axis=1)


def init_ranpac_params(key: jax.Array,
                       input_dim: int,
                       output_dim: int,
                       num_projections: int,
                       lambda_value: float = 0.2,
                       feature_wise: bool = False,
                       weights_dtype=jnp.bfloat16):
    """Parameter init mirroring EnhancedRanPACLayer.__init__ shapes.

    The frozen random projection weights are stored in `weights_dtype` (bf16 by
    default) so the HBM-bound forward streams half the bytes; this one-time
    down-cast lives here, never inside enhanced_ranpac_forward.
    """
    k_w, _ = jax.random.split(key)
    # nn.init.normal_(proj.weight, mean=0, std=1.0); proj.weight *= sqrt(output_dim)
    weights = (jax.random.normal(k_w, (num_projections, output_dim, input_dim),
                                 dtype=jnp.float32)
               * jnp.sqrt(jnp.float32(output_dim))).astype(weights_dtype)
    sqrt_d = math.sqrt(input_dim)
    if feature_wise:
        param = jnp.ones((num_projections, output_dim), jnp.float32) * lambda_value * sqrt_d
    else:
        param = jnp.ones((num_projections, 1), jnp.float32) * lambda_value * sqrt_d
    # NOTE: `param` (and the trainable-ratio masks) are unused in forward(); kept for parity.
    return weights, param


def _reference_forward(x, weights, negative_slope):
    """Pure-JAX reference with the exact (flat-reshape) module semantics."""
    B = x.shape[0]
    P, D_out, _ = weights.shape
    proj = jnp.einsum("bi,poi->pbo",
                      x.astype(jnp.float32), weights.astype(jnp.float32),
                      precision=jax.lax.Precision.HIGHEST)
    proj = jnp.where(proj >= 0, proj, negative_slope * proj)
    return proj.reshape(B, P, D_out).mean(axis=1)


if __name__ == "__main__":
    negative_slope = 0.2
    key = jax.random.PRNGKey(0)
    k_x1, k_w1, k_x2, k_w2 = jax.random.split(key, 4)

    # Case 1: exact-f32 path, single grid step (batch=8, D_in=64, D_out=128, P=2).
    batch, input_dim, output_dim, num_projections = 8, 64, 128, 2
    x1 = jax.random.normal(k_x1, (batch, input_dim), dtype=jnp.float32)
    w1, _ = init_ranpac_params(k_w1, input_dim, output_dim, num_projections,
                               weights_dtype=jnp.float32)
    out1 = jax.block_until_ready(
        enhanced_ranpac_forward(x1, w1, negative_slope))
    ref1 = _reference_forward(x1, w1, negative_slope)
    assert out1.shape == (batch, output_dim)
    assert out1.dtype == jnp.float32
    assert jnp.allclose(out1, ref1, atol=1e-3, rtol=1e-3), \
        float(jnp.max(jnp.abs(out1 - ref1)))

    # Case 2: default bf16-streamed weights, forced multi-step grid (tiny tile
    # budget), non-multiple-of-8 batch, and N % tn != 0 -> exercises batch
    # padding and the out-of-bounds tail weight block.
    batch2, input_dim2, output_dim2, num_projections2 = 6, 64, 192, 3
    x2 = jax.random.normal(k_x2, (batch2, input_dim2), dtype=jnp.float32)
    w2, _ = init_ranpac_params(k_w2, input_dim2, output_dim2, num_projections2)  # bf16
    out2 = jax.block_until_ready(
        enhanced_ranpac_forward(x2, w2, negative_slope,
                                max_weight_tile_bytes=64 * 1024))
    # Reference on the same bf16-quantized operands (the weight cast is part of init).
    ref2 = _reference_forward(x2.astype(jnp.bfloat16), w2, negative_slope)
    assert out2.shape == (batch2, output_dim2)
    assert jnp.allclose(out2, ref2, atol=5e-2, rtol=5e-2), \
        float(jnp.max(jnp.abs(out2 - ref2)))

    print("KERNEL_OK")
</pallas_src>

<mosaic_0001>
module attributes {stable_mosaic.version = 11 : i64} {
  func.func @_ranpac_tile_kernel(%arg0: i32, %arg1: i32, %arg2: memref<8x64xf32, #tpu.memory_space<vmem>>, %arg3: memref<256x64xf32, #tpu.memory_space<vmem>>, %arg4: memref<8x256xf32, #tpu.memory_space<vmem>>) attributes {dimension_semantics = [#tpu.dimension_semantics<parallel>, #tpu.dimension_semantics<parallel>], iteration_bounds = array<i64: 1, 1>, scalar_prefetch = 0 : i64, scratch_operands = 0 : i64, tpu.core_type = #tpu.core_type<tc>, window_params = [{transform_indices = @transform_0, window_bounds = array<i64: 8, 64>}, {transform_indices = @transform_1, window_bounds = array<i64: 256, 64>}, {transform_indices = @transform_2, window_bounds = array<i64: 8, 256>}]} {
    %c0 = arith.constant 0 : index
    %c0_0 = arith.constant 0 : index
    %0 = vector.load %arg2[%c0, %c0_0] : memref<8x64xf32, #tpu.memory_space<vmem>>, vector<8x64xf32>
    %c0_1 = arith.constant 0 : index
    %c0_2 = arith.constant 0 : index
    %1 = vector.load %arg3[%c0_1, %c0_2] : memref<256x64xf32, #tpu.memory_space<vmem>>, vector<256x64xf32>
    %cst = arith.constant dense<0.000000e+00> : vector<8x256xf32>
    %2 = tpu.matmul %0, %1, %cst {dimension_numbers = #tpu.dot_dimension_numbers<[1], [1], [0], [0], [0, 0, 1, 0], [], []>} : vector<8x64xf32>, vector<256x64xf32>, vector<8x256xf32> -> vector<8x256xf32>
    %cst_3 = arith.constant 0.000000e+00 : f32
    %3 = vector.broadcast %cst_3 : f32 to vector<8x256xf32>
    %4 = arith.cmpf oge, %2, %3 : vector<8x256xf32>
    %cst_4 = arith.constant 2.000000e-01 : f32
    %5 = vector.broadcast %cst_4 : f32 to vector<8x256xf32>
    %6 = arith.mulf %5, %2 : vector<8x256xf32>
    %7 = arith.select %4, %2, %6 : vector<8x256xi1>, vector<8x256xf32>
    %c0_5 = arith.constant 0 : index
    %c0_6 = arith.constant 0 : index
    %8 = vector.load %arg4[%c0_5, %c0_6] : memref<8x256xf32, #tpu.memory_space<vmem>>, vector<8x256xf32>
    tpu.vector_store %arg4[%c0_5, %c0_6], %7 {strides = array<i32>} : memref<8x256xf32, #tpu.memory_space<vmem>>, vector<8x256xf32>,
    return
  }
  func.func @transform_0(%arg0: i32, %arg1: i32) -> (i32, i32) {
    %c0_i32 = arith.constant 0 : i32
    %c0_i32_0 = arith.constant 0 : i32
    return %arg1, %c0_i32 : i32, i32
  }
  func.func @transform_1(%arg0: i32, %arg1: i32) -> (i32, i32) {
    %c0_i32 = arith.constant 0 : i32
    %c0_i32_0 = arith.constant 0 : i32
    return %arg0, %c0_i32 : i32, i32
  }
  func.func @transform_2(%arg0: i32, %arg1: i32) -> (i32, i32) {
    %c0_i32 = arith.constant 0 : i32
    return %arg1, %arg0 : i32, i32
  }
}

</mosaic_0001>

<llo_original>
// kernel: tpu_custom_call.1
$region0: #{tpu_custom_call.1}
  #allocation0 [shape = 'u32[]', space=smem, size = 0x4, offset = 0x4, fixed_abs, tag = 'smem constant byte address 0x4 - core index']
  #allocation1 [shape = 'u32[144,128]{1,0:T(1,128)}', space=vmem, size = 0x12000, scoped, tag = 'internal scratch']
  %s0 = inlined_call_operand.vmem [shape: f32[8,64], index: 0, kind: input, shape index: {}]
  %s1 = inlined_call_operand.vmem [shape: f32[256,64], index: 1, kind: input, shape index: {}]
  %s2 = inlined_call_operand.hbm [shape: f32[8,256], index: 2, kind: output, shape index: {}]
  %s3 = sld [smem:[#allocation0]]
  $region18: #{tpu_custom_call.1} parent=0
    _
  %s5 = ssub.s32 1, %s3
  %s6 = scalar_select 0, %s5, %s3
  $region1: #{tpu_custom_call.1} parent=0
    #allocation2 [shape = 'u8[8192]{0}', space=vmem, size = 0x2000, scoped, tag = 'output window, operand 0, single buffered']
    #allocation3 [shape = 's32[1]{0}', space=sflag, size = 0x4, scoped, tag = 'scoped memory for tpu_custom_call.1']
    %7 = vsyncpa [#allocation3], 0
    // Predicated region
    $region2: #{tpu_custom_call.1} parent=1 // pred_check
      _
    $region3: #{tpu_custom_call.1} parent=1 // pred_check_branch
      %9 = sbr.rel (0) target = $region5
    $region4: #{tpu_custom_call.1} parent=1 // pred_region
      _
    $region5: #{tpu_custom_call.1} parent=1 // pred_fallthru
      _
    // Predicated region
    $region6: #{tpu_custom_call.1} parent=1 // pred_check
      _
    $region7: #{tpu_custom_call.1} parent=1 // pred_check_branch
      %11 = sbr.rel (0) target = $region9
    $region8: #{tpu_custom_call.1} parent=1 // pred_region
      _
    $region9: #{tpu_custom_call.1} parent=1 // pred_fallthru
      _
    %v12 = vld [vmem:[%s0] sm:$0xff]
    %v13 = vld [vmem:[%s1] sm:$0xff]
    %v14 = vld [vmem:[%s1 + $0x8] sm:$0xff]
    %v15 = vld [vmem:[%s1 + $0x10] sm:$0xff]
    %v16 = vld [vmem:[%s1 + $0x18] sm:$0xff]
    %v17 = vld [vmem:[%s1 + $0x20] sm:$0xff]
    %v18 = vld [vmem:[%s1 + $0x28] sm:$0xff]
    %v19 = vld [vmem:[%s1 + $0x30] sm:$0xff]
    %v20 = vld [vmem:[%s1 + $0x38] sm:$0xff]
    %v21 = vld [vmem:[%s1 + $0x40] sm:$0xff]
    %v22 = vld [vmem:[%s1 + $0x48] sm:$0xff]
    %v23 = vld [vmem:[%s1 + $0x50] sm:$0xff]
    %v24 = vld [vmem:[%s1 + $0x58] sm:$0xff]
    %v25 = vld [vmem:[%s1 + $0x60] sm:$0xff]
    %v26 = vld [vmem:[%s1 + $0x68] sm:$0xff]
    %v27 = vld [vmem:[%s1 + $0x70] sm:$0xff]
    %v28 = vld [vmem:[%s1 + $0x78] sm:$0xff]
    %v29 = vld [vmem:[%s1 + $0x80] sm:$0xff]
    %v30 = vld [vmem:[%s1 + $0x88] sm:$0xff]
    %v31 = vld [vmem:[%s1 + $0x90] sm:$0xff]
    %v32 = vld [vmem:[%s1 + $0x98] sm:$0xff]
    %v33 = vld [vmem:[%s1 + $0xa0] sm:$0xff]
    %v34 = vld [vmem:[%s1 + $0xa8] sm:$0xff]
    %v35 = vld [vmem:[%s1 + $0xb0] sm:$0xff]
    %v36 = vld [vmem:[%s1 + $0xb8] sm:$0xff]
    %v37 = vld [vmem:[%s1 + $0xc0] sm:$0xff]
    %v38 = vld [vmem:[%s1 + $0xc8] sm:$0xff]
    %v39 = vld [vmem:[%s1 + $0xd0] sm:$0xff]
    %v40 = vld [vmem:[%s1 + $0xd8] sm:$0xff]
    %v41 = vld [vmem:[%s1 + $0xe0] sm:$0xff]
    %v42 = vld [vmem:[%s1 + $0xe8] sm:$0xff]
    %v43 = vld [vmem:[%s1 + $0xf0] sm:$0xff]
    %v44 = vld [vmem:[%s1 + $0xf8] sm:$0xff]
    %vm45 = vcmask 523264
    %v47 = vsel %vm45, %v12, 0
    %v50 = vsel %vm45, %v13, 0
    %v53 = vsel %vm45, %v14, 0
    %v56 = vsel %vm45, %v15, 0
    %v59 = vsel %vm45, %v16, 0
    %v62 = vsel %vm45, %v17, 0
    %v65 = vsel %vm45, %v18, 0
    %v68 = vsel %vm45, %v19, 0
    %v71 = vsel %vm45, %v20, 0
    %v74 = vsel %vm45, %v21, 0
    %v77 = vsel %vm45, %v22, 0
    %v80 = vsel %vm45, %v23, 0
    %v83 = vsel %vm45, %v24, 0
    %v86 = vsel %vm45, %v25, 0
    %v89 = vsel %vm45, %v26, 0
    %v92 = vsel %vm45, %v27, 0
    %v95 = vsel %vm45, %v28, 0
    %v98 = vsel %vm45, %v29, 0
    %v101 = vsel %vm45, %v30, 0
    %v104 = vsel %vm45, %v31, 0
    %v107 = vsel %vm45, %v32, 0
    %v110 = vsel %vm45, %v33, 0
    %v113 = vsel %vm45, %v34, 0
    %v116 = vsel %vm45, %v35, 0
    %v119 = vsel %vm45, %v36, 0
    %v122 = vsel %vm45, %v37, 0
    %v125 = vsel %vm45, %v38, 0
    %v128 = vsel %vm45, %v39, 0
    %v131 = vsel %vm45, %v40, 0
    %v134 = vsel %vm45, %v41, 0
    %v137 = vsel %vm45, %v42, 0
    %v140 = vsel %vm45, %v43, 0
    %v143 = vsel %vm45, %v44, 0
    %145 = vmatprep.subr.mxu0 0.0
    %146 = vmatpush1.xpose.msra.mxu0 %v50
    %147 = vmatprep.subr.mxu0 0.0
    %148 = vmatpush1.xpose.msra.mxu0 %v53
    %149 = vmatprep.subr.mxu0 0.0
    %150 = vmatpush1.xpose.msra.mxu0 %v56
    %151 = vmatprep.subr.mxu0 0.0
    %152 = vmatpush1.xpose.msra.mxu0 %v59
    %153 = vmatprep.subr.mxu0 0.0
    %154 = vmatpush1.xpose.msra.mxu0 %v62
    %155 = vmatprep.subr.mxu0 0.0
    %156 = vmatpush1.xpose.msra.mxu0 %v65
    %157 = vmatprep.subr.mxu0 0.0
    %158 = vmatpush1.xpose.msra.mxu0 %v68
    %159 = vmatprep.subr.mxu0 0.0
    %160 = vmatpush1.xpose.msra.mxu0 %v71
    %161 = vmatprep.subr.mxu0 0.0
    %162 = vmatpush1.xpose.msra.mxu0 %v74
    %163 = vmatprep.subr.mxu0 0.0
    %164 = vmatpush1.xpose.msra.mxu0 %v77
    %165 = vmatprep.subr.mxu0 0.0
    %166 = vmatpush1.xpose.msra.mxu0 %v80
    %167 = vmatprep.subr.mxu0 0.0
    %168 = vmatpush1.xpose.msra.mxu0 %v83
    %169 = vmatprep.subr.mxu0 0.0
    %170 = vmatpush1.xpose.msra.mxu0 %v86
    %171 = vmatprep.subr.mxu0 0.0
    %172 = vmatpush1.xpose.msra.mxu0 %v89
    %173 = vmatprep.subr.mxu0 0.0
    %174 = vmatpush1.xpose.msra.mxu0 %v92
    %175 = vmatprep.subr.mxu0 0.0
    %176 = vmatpush1.xpose.msra.mxu0 %v95
    %177 = vmatprep.subr.mxu0 0.0
    %178 = vmatpush1.xpose.msra.mxu0 %v98
    %179 = vmatprep.subr.mxu0 0.0
    %180 = vmatpush1.xpose.msra.mxu0 %v101
    %181 = vmatprep.subr.mxu0 0.0
    %182 = vmatpush1.xpose.msra.mxu0 %v104
    %183 = vmatprep.subr.mxu0 0.0
    %184 = vmatpush1.xpose.msra.mxu0 %v107
    %185 = vmatprep.subr.mxu0 0.0
    %186 = vmatpush1.xpose.msra.mxu0 %v110
    %187 = vmatprep.subr.mxu0 0.0
    %188 = vmatpush1.xpose.msra.mxu0 %v113
    %189 = vmatprep.subr.mxu0 0.0
    %190 = vmatpush1.xpose.msra.mxu0 %v116
    %191 = vmatprep.subr.mxu0 0.0
    %192 = vmatpush1.xpose.msra.mxu0 %v119
    %193 = vmatprep.subr.mxu0 0.0
    %194 = vmatpush1.xpose.msra.mxu0 %v122
    %195 = vmatprep.subr.mxu0 0.0
    %196 = vmatpush1.xpose.msra.mxu0 %v125
    %197 = vmatprep.subr.mxu0 0.0
    %198 = vmatpush1.xpose.msra.mxu0 %v128
    %199 = vmatprep.subr.mxu0 0.0
    %200 = vmatpush1.xpose.msra.mxu0 %v131
    %201 = vmatprep.subr.mxu0 0.0
    %202 = vmatpush1.xpose.msra.mxu0 %v134
    %203 = vmatprep.subr.mxu0 0.0
    %204 = vmatpush1.xpose.msra.mxu0 %v137
    %205 = vmatprep.subr.mxu0 0.0
    %206 = vmatpush1.xpose.msra.mxu0 %v140
    %207 = vmatprep.subr.mxu0 0.0
    %208 = vmatpush1.xpose.msra.mxu0 %v143
    %209 = vmatprep.mubr.f32.mxu0 0.0
    %210 = vmatmul.mubr.f32.gmra.mrb[0].mxu0 %v47
    %v211 = vpop.f32.mrb[0].mxu0
    %v212 = vadd.f32 0.0, %v211
    %v213 = vpop.f32.mrb[0].mxu0
    %v214 = vadd.f32 0.0, %v213
    %215 = vdwg.mxu0
    %vm216 = vcmp.ge.f32.partialorder %v212, 0.0
    %vm217 = vcmp.ge.f32.partialorder %v214, 0.0
    %v218 = vmul.f32 %v212, 0.2
    %v219 = vmul.f32 %v214, 0.2
    %v220 = vsel %vm216, %v212, %v218
    %v221 = vsel %vm217, %v214, %v219
    %222 = vst [vmem:[#allocation2] sm:$0xff] %v220
    %223 = vst [vmem:[#allocation2 + $0x8] sm:$0xff] %v221
    // Predicated region
    $region10: #{tpu_custom_call.1} parent=1 // pred_check
      _
    $region11: #{tpu_custom_call.1} parent=1 // pred_check_branch
      %225 = sbr.rel (0) target = $region13
    $region12: #{tpu_custom_call.1} parent=1 // pred_region
      %s227 = ssub.s32 256, 256
      %228 = vsyncadd [#allocation3], %s227
      %s230 = sshll.u32 [#allocation2], 4
      %s231 = int_to_ptr.vmem [resolvable:$true] %s230
      %233 = dma.vmem_to_hbm [thread:$0]  %s231, 256, %s2, [#allocation3]
    $region13: #{tpu_custom_call.1} parent=1 // pred_fallthru
      _
    // Predicated region
    $region14: #{tpu_custom_call.1} parent=1 // pred_check
      _
    $region15: #{tpu_custom_call.1} parent=1 // pred_check_branch
      %235 = sbr.rel (0) target = $region17
    $region16: #{tpu_custom_call.1} parent=1 // pred_region
      %236 = dma.done [#allocation3], 256
    $region17: #{tpu_custom_call.1} parent=1 // pred_fallthru
      _
    %237 = vsyncpa [#allocation3], 1

</llo_original>
